<compile_context>
chip_gen: v7x
topology: tpu7x:2x2x1
jax: 0.10.0
libtpu: 0.0.40
codegen_flags: <defaults>
</compile_context>

<pallas_src>
import functools
import math

import jax
import jax.numpy as jnp
from jax import lax
from jax.experimental import pallas as pl
from jax.experimental.pallas import tpu as pltpu


# --------------------------------------------------------------------------
# helpers
# --------------------------------------------------------------------------
def _cdiv(a, b):
    return -(-a // b)


def _round_up(v, m):
    return _cdiv(v, m) * m


def _vmem_capacity_bytes():
    try:
        return int(pltpu.get_tpu_info().vmem_capacity_bytes)
    except Exception:
        return 64 * 1024 * 1024  # v7x-safe fallback


def _pick_tile(dim, cap):
    """Pick a multiple-of-128 tile <= cap minimizing padded overshoot (tie -> bigger)."""
    cands = [c for c in (cap, 384, 256, 128) if 0 < c <= cap and c % 128 == 0]
    if not cands:
        cands = [128]
    best_t, best_key = None, None
    for t in cands:
        key = (_cdiv(dim, t) * t, -t)
        if best_key is None or key < best_key:
            best_key, best_t = key, t
    return best_t


# --------------------------------------------------------------------------
# kernels
# --------------------------------------------------------------------------
def _linear_bias_kernel(x_ref, w_ref, b_ref, o_ref, *, cdt):
    """Single-K-block kernel: o = x @ w.T + b (no accumulator scratch)."""
    acc = lax.dot_general(
        x_ref[...].astype(cdt), w_ref[...].astype(cdt),
        dimension_numbers=(((1,), (1,)), ((), ())),   # contract last dims (trans_b)
        preferred_element_type=jnp.float32)
    o_ref[...] = (acc + b_ref[...].astype(jnp.float32)).astype(o_ref.dtype)


def _linear_bias_acc_kernel(x_ref, w_ref, b_ref, o_ref, acc_ref, *,
                            cdt, in_dim, tk, mask_k):
    """3-D (i,j,k) kernel with resident f32 accumulator across the K axis."""
    k = pl.program_id(2)

    @pl.when(k == 0)
    def _():
        acc_ref[...] = jnp.zeros_like(acc_ref)

    x = x_ref[...]
    w = w_ref[...]
    if mask_k:
        # K tail: edge-block contents are undefined (may be NaN/Inf), so zero
        # the invalid K columns of BOTH operands before the dot.
        rem = in_dim - k * tk
        xi = lax.broadcasted_iota(jnp.int32, x.shape, 1)
        wi = lax.broadcasted_iota(jnp.int32, w.shape, 1)
        x = jnp.where(xi < rem, x, 0)
        w = jnp.where(wi < rem, w, 0)

    acc_ref[...] += lax.dot_general(
        x.astype(cdt), w.astype(cdt),
        dimension_numbers=(((1,), (1,)), ((), ())),
        preferred_element_type=jnp.float32)

    @pl.when(k == pl.num_programs(2) - 1)
    def _():
        o_ref[...] = (acc_ref[...] + b_ref[...].astype(jnp.float32)).astype(o_ref.dtype)


# --------------------------------------------------------------------------
# forward
# --------------------------------------------------------------------------
def linear_norm_forward(x, weight, bias=None, *,
                        compute_dtype=None, out_dtype=None,
                        tm_max=None, tn_max=512, tk_max=512,
                        _force_streamed=False):
    """y = x @ weight.T + bias (torch.nn.Linear semantics) via Pallas.

    x:      (..., in_dim)
    weight: (out_dim, in_dim)   (native PyTorch layout -- never transposed/copied)
    bias:   (out_dim,) or None
    compute_dtype: MXU operand dtype.  Defaults to bfloat16 when x is f32
        (fast MXU path, ~3 decimal digits of per-operand precision loss,
        accumulation stays f32).  Pass jnp.float32 for exact results.
    out_dtype: output dtype (default x.dtype); pass bf16 to halve writeback.
    """
    in_dim = x.shape[-1]
    out_dim, w_in = weight.shape
    assert w_in == in_dim, "weight must be (out_dim, in_dim)"
    lead = x.shape[:-1]
    out_dtype = x.dtype if out_dtype is None else out_dtype
    if compute_dtype is None:
        cdt = jnp.bfloat16 if x.dtype == jnp.float32 else x.dtype
    else:
        cdt = compute_dtype

    x2d = x.reshape(-1, in_dim)          # free (leading-dim reshape)
    m = x2d.shape[0]
    b2d = (jnp.zeros((1, out_dim), jnp.float32) if bias is None
           else bias.reshape(1, out_dim))

    xb = jnp.dtype(x.dtype).itemsize
    wb = jnp.dtype(weight.dtype).itemsize
    ob = jnp.dtype(out_dtype).itemsize
    cb = jnp.dtype(cdt).itemsize

    vmem_cap = _vmem_capacity_bytes()

    # ---------------- resident-weight fast path sizing ----------------------
    tm_res = min(256 if tm_max is None else tm_max, max(_round_up(m, 16), 16))
    if _cdiv(m, tm_res) == 1 and m > 8:
        # give both v7x TensorCores a tile on the parallel axis
        tm_res = max(8, _round_up(_cdiv(m, 2), 8))

    resident_need = (
        2 * tm_res * in_dim * xb            # double-buffered x tiles
        + 2 * out_dim * in_dim * wb         # weight (conservatively x2)
        + 2 * tm_res * out_dim * ob         # double-buffered out tiles
        + 2 * out_dim * 4                   # bias
        + (tm_res * in_dim + out_dim * in_dim) * cb   # in-kernel cast temps
        + tm_res * out_dim * 4              # f32 dot result
    )
    resident_ok = (resident_need <= int(0.6 * vmem_cap)) and not _force_streamed

    if resident_ok:
        gm = _cdiv(m, tm_res)
        grid = (gm,)
        in_specs = [
            pl.BlockSpec((tm_res, in_dim), lambda i: (i, 0)),     # x row tile
            pl.BlockSpec((out_dim, in_dim), lambda i: (0, 0)),    # resident W
            pl.BlockSpec((1, out_dim), lambda i: (0, 0)),         # bias
        ]
        out_specs = pl.BlockSpec((tm_res, out_dim), lambda i: (i, 0))
        kernel = functools.partial(_linear_bias_kernel, cdt=cdt)
        scratch = []
        dims = ("parallel",)
        vmem_need = resident_need
        bytes_accessed = (m * in_dim * xb + out_dim * in_dim * wb
                          + out_dim * 4 + m * out_dim * ob)
    else:
        # ---------------- streamed path ------------------------------------
        tk = in_dim if in_dim <= tk_max else _pick_tile(in_dim, tk_max)
        tn = out_dim if out_dim <= tn_max else _pick_tile(out_dim, tn_max)
        tm = min(512 if tm_max is None else tm_max, max(_round_up(m, 16), 16))
        gm, gn, gk = _cdiv(m, tm), _cdiv(out_dim, tn), _cdiv(in_dim, tk)
        if gm == 1 and gn == 1 and m > 8:
            tm = max(8, _round_up(_cdiv(m, 2), 8))
            gm = _cdiv(m, tm)

        if gk == 1:
            grid = (gm, gn)
            in_specs = [
                pl.BlockSpec((tm, tk), lambda i, j: (i, 0)),
                pl.BlockSpec((tn, tk), lambda i, j: (j, 0)),
                pl.BlockSpec((1, tn), lambda i, j: (0, j)),
            ]
            out_specs = pl.BlockSpec((tm, tn), lambda i, j: (i, j))
            kernel = functools.partial(_linear_bias_kernel, cdt=cdt)
            scratch = []
            dims = ("parallel", "parallel")
        else:
            mask_k = (in_dim % tk) != 0
            grid = (gm, gn, gk)
            in_specs = [
                pl.BlockSpec((tm, tk), lambda i, j, k: (i, k)),
                pl.BlockSpec((tn, tk), lambda i, j, k: (j, k)),
                pl.BlockSpec((1, tn), lambda i, j, k: (0, j)),
            ]
            out_specs = pl.BlockSpec((tm, tn), lambda i, j, k: (i, j))
            kernel = functools.partial(_linear_bias_acc_kernel, cdt=cdt,
                                       in_dim=in_dim, tk=tk, mask_k=mask_k)
            scratch = [pltpu.VMEM((tm, tn), jnp.float32)]
            dims = ("parallel", "parallel", "arbitrary")

        vmem_need = (2 * (tm * tk * xb + tn * tk * wb + tm * tn * ob + tn * 4)
                     + tm * tn * 4 + (tm * tk + tn * tk) * cb)
        # x is re-read gn times, W is re-read gm times in the streamed schedule
        bytes_accessed = (gn * m * in_dim * xb + gm * out_dim * in_dim * wb
                          + out_dim * 4 + m * out_dim * ob)

    vmem_limit = int(min(0.9 * vmem_cap,
                         max(32 * 1024 * 1024, 2 * vmem_need + (4 << 20))))

    cost = pl.CostEstimate(
        flops=2 * m * in_dim * out_dim,
        transcendentals=0,
        bytes_accessed=int(bytes_accessed),
    )

    out2d = pl.pallas_call(
        kernel,
        out_shape=jax.ShapeDtypeStruct((m, out_dim), out_dtype),
        grid_spec=pltpu.PrefetchScalarGridSpec(
            num_scalar_prefetch=0,
            grid=grid,
            in_specs=in_specs,
            out_specs=out_specs,
            scratch_shapes=scratch,
        ),
        compiler_params=pltpu.CompilerParams(
            dimension_semantics=dims,
            vmem_limit_bytes=vmem_limit,
        ),
        cost_estimate=cost,
    )(x2d, weight, b2d)

    return out2d.reshape(*lead, out_dim)


# --------------------------------------------------------------------------
# Xavier init matching the PyTorch module
# --------------------------------------------------------------------------
def init_linear_norm_params(key, in_dim, out_dim, w_init_gain="linear",
                            dtype=jnp.float32):
    assert w_init_gain == "linear"
    gain = 1.0  # calculate_gain('linear') == 1.0
    bound = gain * math.sqrt(6.0 / (in_dim + out_dim))
    k_w, k_b = jax.random.split(key)
    weight = jax.random.uniform(k_w, (out_dim, in_dim), dtype=dtype,
                                minval=-bound, maxval=bound)
    b_bound = 1.0 / math.sqrt(in_dim)
    bias = jax.random.uniform(k_b, (out_dim,), dtype=dtype,
                              minval=-b_bound, maxval=b_bound)
    return weight, bias


if __name__ == "__main__":
    key = jax.random.PRNGKey(0)
    k_x, k_p, k_x2, k_x3, k_p2 = jax.random.split(key, 5)

    batch, seq, in_dim, out_dim = 2, 8, 32, 64
    x = jax.random.normal(k_x, (batch, seq, in_dim), dtype=jnp.float32)
    weight, bias = init_linear_norm_params(k_p, in_dim, out_dim)
    y_ref = x @ weight.T + bias

    # Exact f32 path (resident-weight fast path).
    y32 = jax.block_until_ready(
        linear_norm_forward(x, weight, bias, compute_dtype=jnp.float32))
    assert y32.shape == (batch, seq, out_dim)
    assert jnp.allclose(y32, y_ref, atol=1e-5, rtol=1e-5)

    # Default path: bf16 MXU operands, f32 accumulation (recommended throughput).
    y = jax.block_until_ready(linear_norm_forward(x, weight, bias))
    assert y.shape == (batch, seq, out_dim)
    assert jnp.allclose(y, y_ref, atol=5e-2, rtol=5e-2)

    # Ragged row count (batch*seq not a multiple of 8) -> M edge blocks.
    x_rag = jax.random.normal(k_x2, (3, 5, in_dim), dtype=jnp.float32)
    y_rag = jax.block_until_ready(
        linear_norm_forward(x_rag, weight, bias, compute_dtype=jnp.float32))
    assert y_rag.shape == (3, 5, out_dim)
    assert jnp.allclose(y_rag, x_rag @ weight.T + bias, atol=1e-5, rtol=1e-5)

    # No-bias path.
    y_nb = jax.block_until_ready(
        linear_norm_forward(x, weight, None, compute_dtype=jnp.float32))
    assert jnp.allclose(y_nb, x @ weight.T, atol=1e-5, rtol=1e-5)

    # Force the streamed 3-D kernel (K/N edge blocks + in-kernel K-tail mask)
    # at a small shape so that code path is exercised too.
    in2, out2 = 200, 160
    x_s = jax.random.normal(k_x3, (batch, seq, in2), dtype=jnp.float32)
    w_s, b_s = init_linear_norm_params(k_p2, in2, out2)
    y_s = jax.block_until_ready(
        linear_norm_forward(x_s, w_s, b_s, compute_dtype=jnp.float32,
                            tn_max=128, tk_max=128, _force_streamed=True))
    assert y_s.shape == (batch, seq, out2)
    assert jnp.allclose(y_s, x_s @ w_s.T + b_s, atol=1e-4, rtol=1e-4)

    print("KERNEL_OK")
</pallas_src>

<mosaic_0001>
module attributes {stable_mosaic.version = 11 : i64} {
  func.func @_linear_bias_kernel(%arg0: i32, %arg1: memref<8x32xf32, #tpu.memory_space<vmem>>, %arg2: memref<64x32xf32, #tpu.memory_space<vmem>>, %arg3: memref<1x64xf32, #tpu.memory_space<vmem>>, %arg4: memref<8x64xf32, #tpu.memory_space<vmem>>) attributes {dimension_semantics = [#tpu.dimension_semantics<parallel>], iteration_bounds = array<i64: 2>, scalar_prefetch = 0 : i64, scratch_operands = 0 : i64, tpu.core_type = #tpu.core_type<tc>, window_params = [{transform_indices = @transform_0, window_bounds = array<i64: 8, 32>}, {pipeline_mode = #tpu.pipeline_mode<synchronous>, transform_indices = @transform_1, window_bounds = array<i64: 64, 32>}, {pipeline_mode = #tpu.pipeline_mode<synchronous>, transform_indices = @transform_2, window_bounds = array<i64: 1, 64>}, {transform_indices = @transform_3, window_bounds = array<i64: 8, 64>}]} {
    %c0 = arith.constant 0 : index
    %c0_0 = arith.constant 0 : index
    %0 = vector.load %arg1[%c0, %c0_0] : memref<8x32xf32, #tpu.memory_space<vmem>>, vector<8x32xf32>
    %c0_1 = arith.constant 0 : index
    %c0_2 = arith.constant 0 : index
    %1 = vector.load %arg2[%c0_1, %c0_2] : memref<64x32xf32, #tpu.memory_space<vmem>>, vector<64x32xf32>
    %cst = arith.constant dense<0.000000e+00> : vector<8x64xf32>
    %2 = tpu.matmul %0, %1, %cst {dimension_numbers = #tpu.dot_dimension_numbers<[1], [1], [0], [0], [0, 0, 1, 0], [], []>} : vector<8x32xf32>, vector<64x32xf32>, vector<8x64xf32> -> vector<8x64xf32>
    %c0_3 = arith.constant 0 : index
    %c0_4 = arith.constant 0 : index
    %3 = vector.load %arg3[%c0_3, %c0_4] : memref<1x64xf32, #tpu.memory_space<vmem>>, vector<1x64xf32>
    %4 = vector.broadcast %3 : vector<1x64xf32> to vector<8x64xf32>
    %5 = arith.addf %2, %4 : vector<8x64xf32>
    %c0_5 = arith.constant 0 : index
    %c0_6 = arith.constant 0 : index
    %6 = vector.load %arg4[%c0_5, %c0_6] : memref<8x64xf32, #tpu.memory_space<vmem>>, vector<8x64xf32>
    tpu.vector_store %arg4[%c0_5, %c0_6], %5 {strides = array<i32>} : memref<8x64xf32, #tpu.memory_space<vmem>>, vector<8x64xf32>,
    return
  }
  func.func @transform_0(%arg0: i32) -> (i32, i32) {
    %c0_i32 = arith.constant 0 : i32
    %c0_i32_0 = arith.constant 0 : i32
    return %arg0, %c0_i32 : i32, i32
  }
  func.func @transform_1(%arg0: i32) -> (i32, i32) {
    %c0_i32 = arith.constant 0 : i32
    %c0_i32_0 = arith.constant 0 : i32
    %c0_i32_1 = arith.constant 0 : i32
    return %c0_i32, %c0_i32_0 : i32, i32
  }
  func.func @transform_2(%arg0: i32) -> (i32, i32) {
    %c0_i32 = arith.constant 0 : i32
    %c0_i32_0 = arith.constant 0 : i32
    %c0_i32_1 = arith.constant 0 : i32
    return %c0_i32, %c0_i32_0 : i32, i32
  }
  func.func @transform_3(%arg0: i32) -> (i32, i32) {
    %c0_i32 = arith.constant 0 : i32
    %c0_i32_0 = arith.constant 0 : i32
    return %arg0, %c0_i32 : i32, i32
  }
}

</mosaic_0001>

<llo_original>
// kernel: tpu_custom_call.1
$region0: #{tpu_custom_call.1}
  #allocation0 [shape = 'u32[]', space=smem, size = 0x4, offset = 0x4, fixed_abs, tag = 'smem constant byte address 0x4 - core index']
  #allocation1 [shape = 'u32[144,128]{1,0:T(1,128)}', space=vmem, size = 0x12000, scoped, tag = 'internal scratch']
  %s0 = inlined_call_operand.vmem [shape: f32[16,32], index: 0, kind: input, shape index: {}]
  %s1 = inlined_call_operand.vmem [shape: f32[64,32], index: 1, kind: input, shape index: {}]
  %s2 = inlined_call_operand.vmem [shape: f32[1,64], index: 2, kind: input, shape index: {}]
  %s3 = inlined_call_operand.hbm [shape: f32[16,64], index: 3, kind: output, shape index: {}]
  %s4 = sld [smem:[#allocation0]]
  $region45: #{tpu_custom_call.1} parent=0
    _
  %s6 = ssub.s32 1, %s4
  %s7 = scalar_select 0, %s6, %s4
  $region1: #{tpu_custom_call.1} parent=0
    #allocation2 [shape = 'u8[8192]{0}', space=vmem, size = 0x2000, scoped, tag = 'output window, operand 0']
    #allocation3 [shape = 's32[2]{0}', space=sflag, size = 0x8, scoped, tag = 'scoped memory for tpu_custom_call.1']
    %8 = vsyncpa [#allocation3], 0
    %s9 = scalar_lea.sflag [#allocation3], 1
    %10 = vsyncpa %s9, 0
    loop: start=0, step=1, limit=4
    $region2: #{tpu_custom_call.1} parent=1 // loop_pre_header
      _
    $region3: #{tpu_custom_call.1} parent=1 // loop_header
      %s12 = sphi 0, %s16
      %p13 = scmp.ge.s32.totalorder %s12, 4
      %s22 = sphi 0, %s24
      %s25 = sphi 0, %s22
      %s26 = sphi 0, %s25
      %s42 = sphi 0, %s26
      %s46 = sphi 0, %s46
      %s48 = sphi 0, %s46
      %s49 = sphi 0, %s48
      %s63 = sphi 0, %s49
      %s67 = sphi 0, %s67
      %s69 = sphi 0, %s67
      %s70 = sphi 0, %s69
      %s84 = sphi 0, %s70
      %s90 = sphi 0, %s92
      %s93 = sphi 0, %s90
      %s94 = sphi 0, %s93
      %s110 = sphi 0, %s94
    $region4: #{tpu_custom_call.1} parent=1 // loop_header_branch
      %15 = sbr.rel (%p13) target = $region8
    $region5: #{tpu_custom_call.1} parent=1 // loop_body
      %s17 = ssub.s32 %s12, 1
      %s18 = ssub.s32 %s12, 2
      %s19 = sadd.s32 %s12, 1
      %s20 = ssub.s32 %s12, %s19
      %p21 = scmp.eq.s32.totalorder %s20, 0
      %s23 = sadd.s32 %s22, 1
      %s24 = scalar_select %p21, %s22, %s23
      %p27 = pneg %p21
      %p28 = scmp.eq.s32.totalorder %s12, 1
      %p29 = por %p27, %p28
      %p30 = scmp.ne.s32.totalorder %s22, %s25
      %p31 = scmp.eq.s32.totalorder %s12, 0
      %p32 = por %p30, %p31
      %p33 = scmp.ne.s32.totalorder %s22, %s25
      %p34 = scmp.eq.s32.totalorder %s17, 1
      %p35 = por %p33, %p34
      %p36 = scmp.ne.s32.totalorder %s25, %s26
      %p37 = scmp.eq.s32.totalorder %s17, 0
      %p38 = por %p36, %p37
      %p39 = scmp.ne.s32.totalorder %s25, %s26
      %p40 = scmp.eq.s32.totalorder %s18, 1
      %p41 = por %p39, %p40
      %p43 = scmp.ne.s32.totalorder %s26, %s42
      %p44 = scmp.eq.s32.totalorder %s18, 0
      %p45 = por %p43, %p44
      %s47 = sadd.s32 %s46, 1
      %p50 = scmp.eq.s32.totalorder %s12, 1
      %p51 = scmp.ne.s32.totalorder %s46, %s48
      %p52 = scmp.eq.s32.totalorder %s12, 0
      %p53 = por %p51, %p52
      %p54 = scmp.ne.s32.totalorder %s46, %s48
      %p55 = scmp.eq.s32.totalorder %s17, 1
      %p56 = por %p54, %p55
      %p57 = scmp.ne.s32.totalorder %s48, %s49
      %p58 = scmp.eq.s32.totalorder %s17, 0
      %p59 = por %p57, %p58
      %p60 = scmp.ne.s32.totalorder %s48, %s49
      %p61 = scmp.eq.s32.totalorder %s18, 1
      %p62 = por %p60, %p61
      %p64 = scmp.ne.s32.totalorder %s49, %s63
      %p65 = scmp.eq.s32.totalorder %s18, 0
      %p66 = por %p64, %p65
      %s68 = sadd.s32 %s67, 1
      %p71 = scmp.eq.s32.totalorder %s12, 1
      %p72 = scmp.ne.s32.totalorder %s67, %s69
      %p73 = scmp.eq.s32.totalorder %s12, 0
      %p74 = por %p72, %p73
      %p75 = scmp.ne.s32.totalorder %s67, %s69
      %p76 = scmp.eq.s32.totalorder %s17, 1
      %p77 = por %p75, %p76
      %p78 = scmp.ne.s32.totalorder %s69, %s70
      %p79 = scmp.eq.s32.totalorder %s17, 0
      %p80 = por %p78, %p79
      %p81 = scmp.ne.s32.totalorder %s69, %s70
      %p82 = scmp.eq.s32.totalorder %s18, 1
      %p83 = por %p81, %p82
      %p85 = scmp.ne.s32.totalorder %s70, %s84
      %p86 = scmp.eq.s32.totalorder %s18, 0
      %p87 = por %p85, %p86
      %s88 = ssub.s32 %s12, %s19
      %p89 = scmp.eq.s32.totalorder %s88, 0
      %s91 = sadd.s32 %s90, 1
      %s92 = scalar_select %p89, %s90, %s91
      %p95 = pneg %p89
      %p96 = scmp.eq.s32.totalorder %s12, 1
      %p97 = por %p95, %p96
      %p98 = scmp.ne.s32.totalorder %s90, %s93
      %p99 = scmp.eq.s32.totalorder %s12, 0
      %p100 = por %p98, %p99
      %p101 = scmp.ne.s32.totalorder %s90, %s93
      %p102 = scmp.eq.s32.totalorder %s17, 1
      %p103 = por %p101, %p102
      %p104 = scmp.ne.s32.totalorder %s93, %s94
      %p105 = scmp.eq.s32.totalorder %s17, 0
      %p106 = por %p104, %p105
      %p107 = scmp.ne.s32.totalorder %s93, %s94
      %p108 = scmp.eq.s32.totalorder %s18, 1
      %p109 = por %p107, %p108
      %p111 = scmp.ne.s32.totalorder %s94, %s110
      %p112 = scmp.eq.s32.totalorder %s18, 0
      %p113 = por %p111, %p112
      %p114 = scmp.le.s32.totalorder 1, %s12
      %p115 = scmp.lt.s32.totalorder %s12, 3
      %p116 = pnand %p114, %p115
      %p117 = pneg %p116
      // Predicated region
      $region9: #{tpu_custom_call.1} parent=5 // pred_check
        _
      $region10: #{tpu_custom_call.1} parent=5 // pred_check_branch
        %119 = sbr.rel (%p116) target = $region12
      $region11: #{tpu_custom_call.1} parent=5 // pred_region
        %s120 = ssub.s32 %s12, 1
        // Predicated region
        $region13: #{tpu_custom_call.1} parent=11 // pred_check
          %p121 = pneg %p59
        $region14: #{tpu_custom_call.1} parent=11 // pred_check_branch
          %123 = sbr.rel (%p121) target = $region16
        $region15: #{tpu_custom_call.1} parent=11 // pred_region
          _
        $region16: #{tpu_custom_call.1} parent=11 // pred_fallthru
          _
        // Predicated region
        $region17: #{tpu_custom_call.1} parent=11 // pred_check
          %p124 = pneg %p80
        $region18: #{tpu_custom_call.1} parent=11 // pred_check_branch
          %126 = sbr.rel (%p124) target = $region20
        $region19: #{tpu_custom_call.1} parent=11 // pred_region
          _
        $region20: #{tpu_custom_call.1} parent=11 // pred_fallthru
          _
      $region12: #{tpu_custom_call.1} parent=5 // pred_fallthru
        _
      %p127 = scmp.lt.s32.totalorder %s12, 2
      // Predicated region
      $region21: #{tpu_custom_call.1} parent=5 // pred_check
        %p128 = pneg %p127
      $region22: #{tpu_custom_call.1} parent=5 // pred_check_branch
        %130 = sbr.rel (%p128) target = $region24
      $region23: #{tpu_custom_call.1} parent=5 // pred_region
        // Predicated region
        $region25: #{tpu_custom_call.1} parent=23 // pred_check
          %p131 = pneg %p32
        $region26: #{tpu_custom_call.1} parent=23 // pred_check_branch
          %133 = sbr.rel (%p131) target = $region28
        $region27: #{tpu_custom_call.1} parent=23 // pred_region
          %p134 = scmp.lt.s32.totalorder %s12, 1
          %s135 = scalar_select %p134, %s12, 1
          %s136 = smul.addr %s135, 8
          %s137 = scalar_lea.vmem %s0, %s136
        $region28: #{tpu_custom_call.1} parent=23 // pred_fallthru
          _
      $region24: #{tpu_custom_call.1} parent=5 // pred_fallthru
        _
      %p138 = scmp.le.s32.totalorder 1, %s12
      %p139 = scmp.lt.s32.totalorder %s12, 3
      %p140 = pnand %p138, %p139
      %p141 = pneg %p140
      // Predicated region
      $region29: #{tpu_custom_call.1} parent=5 // pred_check
        _
      $region30: #{tpu_custom_call.1} parent=5 // pred_check_branch
        %143 = sbr.rel (%p140) target = $region32
      $region31: #{tpu_custom_call.1} parent=5 // pred_region
        %s144 = ssub.s32 %s12, 1
        %p145 = scmp.lt.s32.totalorder %s17, 1
        %s146 = scalar_select %p145, %s17, 1
        %s147 = smul.addr %s146, 8
        %s148 = scalar_lea.vmem %s0, %s147
        %p149 = pneg %p38
        %p150 = pneg %p35
        %p151 = pneg %p59
        %p152 = pneg %p56
        %p153 = pneg %p80
        %p154 = pneg %p77
        %p155 = pneg %p106
        %p156 = pneg %p103
        %s157 = sand.u32 %s93, 1
        %s158 = scalar_lea.sflag [#allocation3], %s157
        %s159 = sand.u32 %s93, 1
        %s160 = smul.addr %s159, 8
        %s161 = scalar_lea.vmem [#allocation2], %s160
        %p162 = scmp.lt.s32.totalorder %s17, 1
        %s163 = scalar_select %p162, %s17, 1
        %s164 = smul.addr %s163, 8
        %s165 = scalar_lea.vmem %s0, %s164
        %v166 = vld [vmem:[%s165] sm:$0xff]
        %v167 = vld [vmem:[%s1] sm:$0xff]
        %v168 = vld [vmem:[%s1 + $0x8] sm:$0xff]
        %v169 = vld [vmem:[%s1 + $0x10] sm:$0xff]
        %v170 = vld [vmem:[%s1 + $0x18] sm:$0xff]
        %v171 = vld [vmem:[%s1 + $0x20] sm:$0xff]
        %v172 = vld [vmem:[%s1 + $0x28] sm:$0xff]
        %v173 = vld [vmem:[%s1 + $0x30] sm:$0xff]
        %v174 = vld [vmem:[%s1 + $0x38] sm:$0xff]
        %v175 = vld [vmem:[%s2] sm:$0x1]
        %v177 = vlaneseq
        %v178 = vshrl.u32 %v177, 7
        %v179 = vsub.s32 0, %v178
        %v180 = vrot.slane %v175, %v179
        %vm182 = vcmask 261120
        %v184 = vsel %vm182, %v166, 0
        %v187 = vsel %vm182, %v167, 0
        %v190 = vsel %vm182, %v168, 0
        %v193 = vsel %vm182, %v169, 0
        %v196 = vsel %vm182, %v170, 0
        %v199 = vsel %vm182, %v171, 0
        %v202 = vsel %vm182, %v172, 0
        %v205 = vsel %vm182, %v173, 0
        %v208 = vsel %vm182, %v174, 0
        %210 = vmatprep.subr.mxu0 0.0
        %211 = vmatpush1.xpose.msra.mxu0 %v187
        %212 = vmatprep.subr.mxu0 0.0
        %213 = vmatpush1.xpose.msra.mxu0 %v190
        %214 = vmatprep.subr.mxu0 0.0
        %215 = vmatpush1.xpose.msra.mxu0 %v193
        %216 = vmatprep.subr.mxu0 0.0
        %217 = vmatpush1.xpose.msra.mxu0 %v196
        %218 = vmatprep.subr.mxu0 0.0
        %219 = vmatpush1.xpose.msra.mxu0 %v199
        %220 = vmatprep.subr.mxu0 0.0
        %221 = vmatpush1.xpose.msra.mxu0 %v202
        %222 = vmatprep.subr.mxu0 0.0
        %223 = vmatpush1.xpose.msra.mxu0 %v205
        %224 = vmatprep.subr.mxu0 0.0
        %225 = vmatpush1.xpose.msra.mxu0 %v208
        %226 = vmatprep.subr.mxu0 0.0
        %227 = vmatpush1.xpose.msra.mxu0 0.0
        %228 = vmatprep.subr.mxu0 0.0
        %229 = vmatpush1.xpose.msra.mxu0 0.0
        %230 = vmatprep.subr.mxu0 0.0
        %231 = vmatpush1.xpose.msra.mxu0 0.0
        %232 = vmatprep.subr.mxu0 0.0
        %233 = vmatpush1.xpose.msra.mxu0 0.0
        %234 = vmatprep.subr.mxu0 0.0
        %235 = vmatpush1.xpose.msra.mxu0 0.0
        %236 = vmatprep.subr.mxu0 0.0
        %237 = vmatpush1.xpose.msra.mxu0 0.0
        %238 = vmatprep.subr.mxu0 0.0
        %239 = vmatpush1.xpose.msra.mxu0 0.0
        %240 = vmatprep.subr.mxu0 0.0
        %241 = vmatpush1.xpose.msra.mxu0 0.0
        %242 = vmatprep.subr.mxu0 0.0
        %243 = vmatpush1.xpose.msra.mxu0 0.0
        %244 = vmatprep.subr.mxu0 0.0
        %245 = vmatpush1.xpose.msra.mxu0 0.0
        %246 = vmatprep.subr.mxu0 0.0
        %247 = vmatpush1.xpose.msra.mxu0 0.0
        %248 = vmatprep.subr.mxu0 0.0
        %249 = vmatpush1.xpose.msra.mxu0 0.0
        %250 = vmatprep.subr.mxu0 0.0
        %251 = vmatpush1.xpose.msra.mxu0 0.0
        %252 = vmatprep.subr.mxu0 0.0
        %253 = vmatpush1.xpose.msra.mxu0 0.0
        %254 = vmatprep.subr.mxu0 0.0
        %255 = vmatpush1.xpose.msra.mxu0 0.0
        %256 = vmatprep.subr.mxu0 0.0
        %257 = vmatpush1.xpose.msra.mxu0 0.0
        %258 = vmatprep.subr.mxu0 0.0
        %259 = vmatpush1.xpose.msra.mxu0 0.0
        %260 = vmatprep.subr.mxu0 0.0
        %261 = vmatpush1.xpose.msra.mxu0 0.0
        %262 = vmatprep.subr.mxu0 0.0
        %263 = vmatpush1.xpose.msra.mxu0 0.0
        %264 = vmatprep.subr.mxu0 0.0
        %265 = vmatpush1.xpose.msra.mxu0 0.0
        %266 = vmatprep.subr.mxu0 0.0
        %267 = vmatpush1.xpose.msra.mxu0 0.0
        %268 = vmatprep.subr.mxu0 0.0
        %269 = vmatpush1.xpose.msra.mxu0 0.0
        %270 = vmatprep.subr.mxu0 0.0
        %271 = vmatpush1.xpose.msra.mxu0 0.0
        %272 = vmatprep.subr.mxu0 0.0
        %273 = vmatpush1.xpose.msra.mxu0 0.0
        %274 = vmatprep.mubr.f32.mxu0 0.0
        %275 = vmatmul.mubr.f32.gmra.mrb[0].mxu0 %v184
        %v276 = vpop.f32.mrb[0].mxu0
        %v277 = vadd.f32 %v180, %v276
        %v278 = vpop.f32.mrb[0].mxu0
        %279 = vdwg.mxu0
        %vm280 = vcmask 523264
        %281 = vst.msk [vmem:[%s161] sm:$0xff] %vm280, %v277
        %s282 = sand.u32 %s93, 1
        %s283 = scalar_lea.sflag [#allocation3], %s282
        %s284 = sand.u32 %s93, 1
        %s285 = smul.addr %s284, 8
        %s286 = scalar_lea.vmem [#allocation2], %s285
        // Predicated region
        $region33: #{tpu_custom_call.1} parent=31 // pred_check
          %p287 = pneg %p103
        $region34: #{tpu_custom_call.1} parent=31 // pred_check_branch
          %289 = sbr.rel (%p287) target = $region36
        $region35: #{tpu_custom_call.1} parent=31 // pred_region
          %s291 = ssub.s32 128, 128
          %292 = vsyncadd %s283, %s291
          %s293 = smul.addr %s17, 128
          %s294 = scalar_lea.hbm %s3, %s293
          %s296 = sshll.u32 %s286, 4
          %s297 = int_to_ptr.vmem [resolvable:$true] %s296
          %299 = dma.vmem_to_hbm [thread:$0]  %s297, 128, %s294, %s283
        $region36: #{tpu_custom_call.1} parent=31 // pred_fallthru
          _
      $region32: #{tpu_custom_call.1} parent=5 // pred_fallthru
        _
      %p300 = scmp.le.s32.totalorder 2, %s12
      // Predicated region
      $region37: #{tpu_custom_call.1} parent=5 // pred_check
        %p301 = pneg %p300
      $region38: #{tpu_custom_call.1} parent=5 // pred_check_branch
        %303 = sbr.rel (%p301) target = $region40
      $region39: #{tpu_custom_call.1} parent=5 // pred_region
        %s304 = ssub.s32 %s12, 2
        // Predicated region
        $region41: #{tpu_custom_call.1} parent=39 // pred_check
          %p305 = pneg %p109
        $region42: #{tpu_custom_call.1} parent=39 // pred_check_branch
          %307 = sbr.rel (%p305) target = $region44
        $region43: #{tpu_custom_call.1} parent=39 // pred_region
          %s308 = sand.u32 %s94, 1
          %s309 = scalar_lea.sflag [#allocation3], %s308
          %s310 = sand.u32 %s94, 1
          %s311 = smul.addr %s310, 8
          %s312 = scalar_lea.vmem [#allocation2], %s311
          %313 = dma.done %s309, 128
        $region44: #{tpu_custom_call.1} parent=39 // pred_fallthru
          _
      $region40: #{tpu_custom_call.1} parent=5 // pred_fallthru
        _
    $region6: #{tpu_custom_call.1} parent=1 // loop_footer
      %s16 = sadd.s32 1, %s12
    $region7: #{tpu_custom_call.1} parent=1 // loop_footer_branch
      %11 = sbr.rel target = $region3
    $region8: #{tpu_custom_call.1} parent=1 // loop_exit
      _
    %314 = vsyncpa [#allocation3], 1
    %s315 = scalar_lea.sflag [#allocation3], 1
    %316 = vsyncpa %s315, 1

</llo_original>
